<compile_context>
chip_gen: v6e
topology: v6e:2x2x1
jax: 0.10.0
libtpu: 0.0.40
codegen_flags: <defaults>
</compile_context>

<pallas_src>
import functools

import jax
import jax.numpy as jnp
import numpy as np
from jax import lax
from jax.experimental import pallas as pl
from jax.experimental.pallas import tpu as pltpu

LANE = 128  # lane width: output dim padded to a multiple of this


def _round_up(x, m):
    return (x + m - 1) // m * m


def fasttext_kernel(ids_ref, tbl_ref, w_ref, b_ref, out_ref, acc_ref, *,
                    tile_b, seq_chunk, seq_len):
    # Grid: (batch_tiles, seq_chunks).  Per step we pool a (tile_b, seq_chunk)
    # block of token ids against the VMEM-resident embedding table into an f32
    # (tile_b, E) accumulator; on the last sequence chunk we do one
    # (tile_b, E) @ (E, O_pad) MXU matmul + bias and store a lane-dense tile.
    bt = pl.program_id(0)                 # batch tile        ("parallel")
    sc = pl.program_id(1)                 # sequence chunk    ("arbitrary")
    emb_dim = tbl_ref.shape[1]

    # Zero the pooled-sum accumulator once per batch tile (full-tile store).
    @pl.when(sc == 0)
    def _init():
        acc_ref[...] = jnp.zeros_like(acc_ref)

    zero_row = jnp.zeros((1, emb_dim), jnp.float32)   # hoisted out of the loops
    row0 = bt * tile_b
    col0 = sc * seq_chunk

    def row_body(b, carry):
        # Sum `seq_chunk` embedding rows for batch row `b` of this tile.  The
        # gather is a dynamic-slice load from the VMEM-resident table; padded
        # token slots index the all-zero row appended to the table.
        def tok_body(s, row_sum):
            tok = ids_ref[row0 + b, col0 + s]          # cheap SMEM scalar read
            return row_sum + tbl_ref[pl.ds(tok, 1), :]

        row_sum = lax.fori_loop(0, seq_chunk, tok_body, zero_row,
                                unroll=True if seq_chunk <= 16 else 8)
        # One accumulator update per (row, chunk): the masked single-sublane
        # store is amortized over seq_chunk gathered tokens.
        acc_ref[pl.ds(b, 1), :] += row_sum
        return carry

    lax.fori_loop(0, tile_b, row_body, 0)

    # NOTE: correctness of the resident accumulator relies on the seq-chunk
    # axis being sequential per batch tile (it is the innermost, "arbitrary"
    # grid axis); do not mark it "parallel".
    @pl.when(sc == pl.num_programs(1) - 1)
    def _finalize():
        pooled = acc_ref[...] * (1.0 / seq_len)        # avg_pool2d over seq
        out_ref[...] = (
            jnp.dot(pooled, w_ref[...], preferred_element_type=jnp.float32)
            + b_ref[...]
        ).astype(out_ref.dtype)


def fasttext_forward(text, emb_table, w, b):
    """FastText forward.

    text:      (S, B) int token ids (seq-major, as in the PyTorch module)
    emb_table: (V, E) float embedding weights
    w:         (E, O) label-layer weight (input-major)
    b:         (O,)   label-layer bias
    returns:   (B, O) float32
    """
    S, B = text.shape
    V, E = emb_table.shape
    O = w.shape[1]

    TB = min(128, _round_up(B, 8))     # batch rows per MXU tile (128 when possible)
    SC = min(S, 128)                   # tokens pooled per grid step
    O_pad = _round_up(O, LANE)         # lane-dense output tile
    num_bt = pl.cdiv(B, TB)
    num_sc = pl.cdiv(S, SC)
    B_pad = num_bt * TB
    S_pad = num_sc * SC

    # VMEM-resident table in f32 (exact parity with the f32 PyTorch module),
    # with one extra all-zero row at index V used by padded id slots.  E stays
    # unpadded (pad only if you want lane-dense rows for production E >= 128).
    tbl = jnp.concatenate(
        [emb_table.astype(jnp.float32), jnp.zeros((1, E), jnp.float32)], axis=0)
    V_eff = V + 1

    w_p = jnp.zeros((E, O_pad), jnp.float32).at[:, :O].set(w.astype(jnp.float32))
    b_p = jnp.zeros((1, O_pad), jnp.float32).at[0, :O].set(b.astype(jnp.float32))

    # Batch-major ids; padded (batch or sequence) slots -> the zero row, so the
    # mean can always divide by the true S.
    # TODO(synk): for very large S*B, deliver ids per (bt, sc) block via an
    # SMEM-windowed BlockSpec instead of keeping the whole array in SMEM.
    ids = jnp.full((B_pad, S_pad), V, jnp.int32).at[:B, :S].set(
        text.astype(jnp.int32).T)

    # VMEM budget: resident table (double-buffered by the pipeline) + weights +
    # output/accumulator tiles, capped at 48 MiB so it is safe on v7x's 64 MiB
    # physical VMEM; v5e/v6e (128 MiB) could go ~2x higher.
    lane_e = _round_up(E, LANE)
    vmem_needed = (
        2 * _round_up(V_eff, 8) * lane_e * 4    # resident table (x2 buffers)
        + 2 * _round_up(E, 8) * O_pad * 4       # label weight
        + 2 * 8 * O_pad * 4                     # bias
        + 2 * TB * O_pad * 4                    # output tile
        + TB * lane_e * 4)                      # f32 accumulator scratch
    V7X_SAFE_VMEM = 48 << 20
    if vmem_needed > V7X_SAFE_VMEM:
        # TODO(synk): fall back to a manual multi-in-flight DMA gather
        # (table in pl.ANY/HBM + pltpu.make_async_copy) for huge vocabularies.
        raise NotImplementedError(
            "embedding table too large for the VMEM-resident gather path")
    vmem_limit = int(min(max(vmem_needed + (8 << 20), 16 << 20), V7X_SAFE_VMEM))

    kernel = functools.partial(fasttext_kernel, tile_b=TB, seq_chunk=SC,
                               seq_len=S)

    out = pl.pallas_call(
        kernel,
        out_shape=jax.ShapeDtypeStruct((B_pad, O_pad), jnp.float32),
        grid_spec=pltpu.PrefetchScalarGridSpec(
            num_scalar_prefetch=1,                 # token ids -> SMEM
            grid=(num_bt, num_sc),
            in_specs=[
                # Embedding table: constant block index -> VMEM-resident.
                # Block == full array dims, so no (8,128) divisibility issue.
                pl.BlockSpec((V_eff, E), lambda bt, sc, ids: (0, 0)),
                # Label weight / bias: VMEM-resident as well.
                pl.BlockSpec((E, O_pad), lambda bt, sc, ids: (0, 0)),
                pl.BlockSpec((1, O_pad), lambda bt, sc, ids: (0, 0)),
            ],
            out_specs=pl.BlockSpec((TB, O_pad), lambda bt, sc, ids: (bt, 0)),
            scratch_shapes=[pltpu.VMEM((TB, E), jnp.float32)],
        ),
        compiler_params=pltpu.CompilerParams(
            # Batch tiles can be split across TensorCores (v7x megacore needs
            # num_bt >= 2 to use both); the seq-chunk reduction must stay
            # sequential for the accumulator pattern.
            dimension_semantics=("parallel", "arbitrary"),
            vmem_limit_bytes=vmem_limit,
        ),
        cost_estimate=pl.CostEstimate(
            flops=B_pad * S_pad * E + 2 * B_pad * E * O_pad,
            transcendentals=0,
            bytes_accessed=(B_pad * S_pad * 4          # ids
                            + V_eff * E * 4            # embedding table
                            + E * O_pad * 4 + O_pad * 4
                            + B_pad * O_pad * 4),      # output
        ),
    )(ids, tbl, w_p, b_p)

    return out[:B, :O]


if __name__ == "__main__":
    # Small, deterministic setup consistent with the module's __init__.
    vocab_size = 50
    embedding_dim = 32
    output_dim = 8
    padding_idx = 1
    unk_idx = 0
    seq_len = 8
    batch = 4

    key = jax.random.PRNGKey(0)
    k_emb, k_w, k_b, k_txt = jax.random.split(key, 4)

    emb_table = jax.random.normal(k_emb, (vocab_size, embedding_dim),
                                  dtype=jnp.float32)
    emb_table = emb_table.at[unk_idx].set(0.0)
    emb_table = emb_table.at[padding_idx].set(0.0)

    w = jax.random.normal(k_w, (embedding_dim, output_dim), dtype=jnp.float32) * 0.1
    b = jax.random.normal(k_b, (output_dim,), dtype=jnp.float32) * 0.1

    # Token ids: (seq_len, batch), same axis convention as the PyTorch module.
    text = jax.random.randint(k_txt, (seq_len, batch), 0, vocab_size,
                              dtype=jnp.int32)

    out = jax.jit(fasttext_forward)(text, emb_table, w, b)
    out = jax.block_until_ready(out)

    # Pure-JAX f32 reference (matches the PyTorch forward exactly).
    # NOTE: like avg_pool2d, the mean divides by the full seq_len, including
    # (zero-embedding) padding tokens -- intentional, matches the module.
    embedded_ref = jnp.take(emb_table, text, axis=0)          # (S, B, E)
    pooled_ref = jnp.mean(embedded_ref, axis=0)               # (B, E)
    ref = pooled_ref @ w + b
    np.testing.assert_allclose(np.asarray(out), np.asarray(ref),
                               rtol=1e-5, atol=1e-5)

    print("KERNEL_OK")
</pallas_src>

<mosaic_0001>
module attributes {stable_mosaic.version = 11 : i64} {
  func.func @fasttext_kernel(%arg0: i32, %arg1: i32, %arg2: memref<8x8xi32, #tpu.memory_space<smem>>, %arg3: memref<51x32xf32, #tpu.memory_space<vmem>>, %arg4: memref<32x128xf32, #tpu.memory_space<vmem>>, %arg5: memref<1x128xf32, #tpu.memory_space<vmem>>, %arg6: memref<8x128xf32, #tpu.memory_space<vmem>>, %arg7: memref<8x32xf32, #tpu.memory_space<vmem>>) attributes {dimension_semantics = [#tpu.dimension_semantics<parallel>, #tpu.dimension_semantics<arbitrary>], iteration_bounds = array<i64: 1, 1>, scalar_prefetch = 1 : i64, scratch_operands = 1 : i64, tpu.core_type = #tpu.core_type<tc>, window_params = [{pipeline_mode = #tpu.pipeline_mode<synchronous>, transform_indices = @transform_0, window_bounds = array<i64: 51, 32>}, {pipeline_mode = #tpu.pipeline_mode<synchronous>, transform_indices = @transform_1, window_bounds = array<i64: 32, 128>}, {pipeline_mode = #tpu.pipeline_mode<synchronous>, transform_indices = @transform_2, window_bounds = array<i64: 1, 128>}, {transform_indices = @transform_3, window_bounds = array<i64: 8, 128>}]} {
    %c0_i32 = arith.constant 0 : i32
    %0 = arith.cmpi eq, %arg1, %c0_i32 : i32
    %1 = arith.extui %0 : i1 to i32
    %c0_i32_0 = arith.constant 0 : i32
    %2 = arith.cmpi ne, %1, %c0_i32_0 : i32
    scf.if %2 {
      %cst_7 = arith.constant 0.000000e+00 : f32
      %10 = vector.broadcast %cst_7 : f32 to vector<8x32xf32>
      %c0 = arith.constant 0 : index
      %c0_8 = arith.constant 0 : index
      %11 = vector.load %arg7[%c0, %c0_8] : memref<8x32xf32, #tpu.memory_space<vmem>>, vector<8x32xf32>
      tpu.vector_store %arg7[%c0, %c0_8], %10 {strides = array<i32>} : memref<8x32xf32, #tpu.memory_space<vmem>>, vector<8x32xf32>,
    } else {
    }
    %cst = arith.constant 0.000000e+00 : f32
    %3 = vector.broadcast %cst : f32 to vector<1x32xf32>
    %c8_i32 = arith.constant 8 : i32
    %4 = arith.muli %arg0, %c8_i32 : i32
    %c8_i32_1 = arith.constant 8 : i32
    %5 = arith.muli %arg1, %c8_i32_1 : i32
    %c0_i32_2 = arith.constant 0 : i32
    %c8_i32_3 = arith.constant 8 : i32
    %6 = arith.addi %c0_i32_2, %c8_i32_3 : i32
    %c1_i32 = arith.constant 1 : i32
    scf.for %arg8 = %c0_i32_2 to %6 step %c1_i32  : i32 {
      %c0_i32_7 = arith.constant 0 : i32
      %10 = arith.addi %4, %arg8 : i32
      %11 = arith.addi %5, %c0_i32_7 : i32
      %12 = arith.index_cast %10 : i32 to index
      %13 = arith.index_cast %11 : i32 to index
      %14 = memref.load %arg2[%12, %13] : memref<8x8xi32, #tpu.memory_space<smem>>
      %15 = arith.index_cast %14 : i32 to index
      %c0 = arith.constant 0 : index
      %16 = vector.load %arg3[%15, %c0] : memref<51x32xf32, #tpu.memory_space<vmem>>, vector<1x32xf32>
      %17 = arith.addf %3, %16 : vector<1x32xf32>
      %c1_i32_8 = arith.constant 1 : i32
      %18 = arith.addi %4, %arg8 : i32
      %19 = arith.addi %5, %c1_i32_8 : i32
      %20 = arith.index_cast %18 : i32 to index
      %21 = arith.index_cast %19 : i32 to index
      %22 = memref.load %arg2[%20, %21] : memref<8x8xi32, #tpu.memory_space<smem>>
      %23 = arith.index_cast %22 : i32 to index
      %c0_9 = arith.constant 0 : index
      %24 = vector.load %arg3[%23, %c0_9] : memref<51x32xf32, #tpu.memory_space<vmem>>, vector<1x32xf32>
      %25 = arith.addf %17, %24 : vector<1x32xf32>
      %c2_i32 = arith.constant 2 : i32
      %26 = arith.addi %4, %arg8 : i32
      %27 = arith.addi %5, %c2_i32 : i32
      %28 = arith.index_cast %26 : i32 to index
      %29 = arith.index_cast %27 : i32 to index
      %30 = memref.load %arg2[%28, %29] : memref<8x8xi32, #tpu.memory_space<smem>>
      %31 = arith.index_cast %30 : i32 to index
      %c0_10 = arith.constant 0 : index
      %32 = vector.load %arg3[%31, %c0_10] : memref<51x32xf32, #tpu.memory_space<vmem>>, vector<1x32xf32>
      %33 = arith.addf %25, %32 : vector<1x32xf32>
      %c3_i32 = arith.constant 3 : i32
      %34 = arith.addi %4, %arg8 : i32
      %35 = arith.addi %5, %c3_i32 : i32
      %36 = arith.index_cast %34 : i32 to index
      %37 = arith.index_cast %35 : i32 to index
      %38 = memref.load %arg2[%36, %37] : memref<8x8xi32, #tpu.memory_space<smem>>
      %39 = arith.index_cast %38 : i32 to index
      %c0_11 = arith.constant 0 : index
      %40 = vector.load %arg3[%39, %c0_11] : memref<51x32xf32, #tpu.memory_space<vmem>>, vector<1x32xf32>
      %41 = arith.addf %33, %40 : vector<1x32xf32>
      %c4_i32 = arith.constant 4 : i32
      %42 = arith.addi %4, %arg8 : i32
      %43 = arith.addi %5, %c4_i32 : i32
      %44 = arith.index_cast %42 : i32 to index
      %45 = arith.index_cast %43 : i32 to index
      %46 = memref.load %arg2[%44, %45] : memref<8x8xi32, #tpu.memory_space<smem>>
      %47 = arith.index_cast %46 : i32 to index
      %c0_12 = arith.constant 0 : index
      %48 = vector.load %arg3[%47, %c0_12] : memref<51x32xf32, #tpu.memory_space<vmem>>, vector<1x32xf32>
      %49 = arith.addf %41, %48 : vector<1x32xf32>
      %c5_i32 = arith.constant 5 : i32
      %50 = arith.addi %4, %arg8 : i32
      %51 = arith.addi %5, %c5_i32 : i32
      %52 = arith.index_cast %50 : i32 to index
      %53 = arith.index_cast %51 : i32 to index
      %54 = memref.load %arg2[%52, %53] : memref<8x8xi32, #tpu.memory_space<smem>>
      %55 = arith.index_cast %54 : i32 to index
      %c0_13 = arith.constant 0 : index
      %56 = vector.load %arg3[%55, %c0_13] : memref<51x32xf32, #tpu.memory_space<vmem>>, vector<1x32xf32>
      %57 = arith.addf %49, %56 : vector<1x32xf32>
      %c6_i32 = arith.constant 6 : i32
      %58 = arith.addi %4, %arg8 : i32
      %59 = arith.addi %5, %c6_i32 : i32
      %60 = arith.index_cast %58 : i32 to index
      %61 = arith.index_cast %59 : i32 to index
      %62 = memref.load %arg2[%60, %61] : memref<8x8xi32, #tpu.memory_space<smem>>
      %63 = arith.index_cast %62 : i32 to index
      %c0_14 = arith.constant 0 : index
      %64 = vector.load %arg3[%63, %c0_14] : memref<51x32xf32, #tpu.memory_space<vmem>>, vector<1x32xf32>
      %65 = arith.addf %57, %64 : vector<1x32xf32>
      %c7_i32 = arith.constant 7 : i32
      %66 = arith.addi %4, %arg8 : i32
      %67 = arith.addi %5, %c7_i32 : i32
      %68 = arith.index_cast %66 : i32 to index
      %69 = arith.index_cast %67 : i32 to index
      %70 = memref.load %arg2[%68, %69] : memref<8x8xi32, #tpu.memory_space<smem>>
      %71 = arith.index_cast %70 : i32 to index
      %c0_15 = arith.constant 0 : index
      %72 = vector.load %arg3[%71, %c0_15] : memref<51x32xf32, #tpu.memory_space<vmem>>, vector<1x32xf32>
      %73 = arith.addf %65, %72 : vector<1x32xf32>
      %c8_i32_16 = arith.constant 8 : i32
      %74 = arith.index_cast %arg8 : i32 to index
      %c0_17 = arith.constant 0 : index
      %75 = vector.load %arg7[%74, %c0_17] : memref<8x32xf32, #tpu.memory_space<vmem>>, vector<1x32xf32>
      %76 = arith.addf %75, %73 : vector<1x32xf32>
      %77 = arith.index_cast %arg8 : i32 to index
      %c0_18 = arith.constant 0 : index
      %78 = vector.load %arg7[%77, %c0_18] : memref<8x32xf32, #tpu.memory_space<vmem>>, vector<1x32xf32>
      tpu.vector_store %arg7[%77, %c0_18], %76 {strides = array<i32>} : memref<8x32xf32, #tpu.memory_space<vmem>>, vector<1x32xf32>,
    }
    %c8_i32_4 = arith.constant 8 : i32
    %c0_i32_5 = arith.constant 0 : i32
    %7 = arith.cmpi eq, %arg1, %c0_i32_5 : i32
    %8 = arith.extui %7 : i1 to i32
    %c0_i32_6 = arith.constant 0 : i32
    %9 = arith.cmpi ne, %8, %c0_i32_6 : i32
    scf.if %9 {
      %c0 = arith.constant 0 : index
      %c0_7 = arith.constant 0 : index
      %10 = vector.load %arg7[%c0, %c0_7] : memref<8x32xf32, #tpu.memory_space<vmem>>, vector<8x32xf32>
      %cst_8 = arith.constant 1.250000e-01 : f32
      %11 = vector.broadcast %cst_8 : f32 to vector<8x32xf32>
      %12 = arith.mulf %10, %11 : vector<8x32xf32>
      %c0_9 = arith.constant 0 : index
      %c0_10 = arith.constant 0 : index
      %13 = vector.load %arg4[%c0_9, %c0_10] : memref<32x128xf32, #tpu.memory_space<vmem>>, vector<32x128xf32>
      %cst_11 = arith.constant dense<0.000000e+00> : vector<8x128xf32>
      %14 = tpu.matmul %12, %13, %cst_11 {dimension_numbers = #tpu.dot_dimension_numbers<[1], [0], [0], [1], [0, 0, 1, 1], [], []>} : vector<8x32xf32>, vector<32x128xf32>, vector<8x128xf32> -> vector<8x128xf32>
      %c0_12 = arith.constant 0 : index
      %c0_13 = arith.constant 0 : index
      %15 = vector.load %arg5[%c0_12, %c0_13] : memref<1x128xf32, #tpu.memory_space<vmem>>, vector<1x128xf32>
      %16 = vector.broadcast %15 : vector<1x128xf32> to vector<8x128xf32>
      %17 = arith.addf %14, %16 : vector<8x128xf32>
      %c0_14 = arith.constant 0 : index
      %c0_15 = arith.constant 0 : index
      %18 = vector.load %arg6[%c0_14, %c0_15] : memref<8x128xf32, #tpu.memory_space<vmem>>, vector<8x128xf32>
      tpu.vector_store %arg6[%c0_14, %c0_15], %17 {strides = array<i32>} : memref<8x128xf32, #tpu.memory_space<vmem>>, vector<8x128xf32>,
    } else {
    }
    return
  }
  func.func @transform_0(%arg0: i32, %arg1: i32, %arg2: memref<8x8xi32, #tpu.memory_space<smem>>) -> (i32, i32) {
    %c0_i32 = arith.constant 0 : i32
    %c0_i32_0 = arith.constant 0 : i32
    %c0_i32_1 = arith.constant 0 : i32
    return %c0_i32, %c0_i32_0 : i32, i32
  }
  func.func @transform_1(%arg0: i32, %arg1: i32, %arg2: memref<8x8xi32, #tpu.memory_space<smem>>) -> (i32, i32) {
    %c0_i32 = arith.constant 0 : i32
    %c0_i32_0 = arith.constant 0 : i32
    %c0_i32_1 = arith.constant 0 : i32
    return %c0_i32, %c0_i32_0 : i32, i32
  }
  func.func @transform_2(%arg0: i32, %arg1: i32, %arg2: memref<8x8xi32, #tpu.memory_space<smem>>) -> (i32, i32) {
    %c0_i32 = arith.constant 0 : i32
    %c0_i32_0 = arith.constant 0 : i32
    %c0_i32_1 = arith.constant 0 : i32
    return %c0_i32, %c0_i32_0 : i32, i32
  }
  func.func @transform_3(%arg0: i32, %arg1: i32, %arg2: memref<8x8xi32, #tpu.memory_space<smem>>) -> (i32, i32) {
    %c0_i32 = arith.constant 0 : i32
    %c0_i32_0 = arith.constant 0 : i32
    return %arg0, %c0_i32 : i32, i32
  }
}

</mosaic_0001>

<llo_original>
// kernel: fasttext_forward.1
$region0: #{fasttext_forward.1}
  #allocation0 [shape = 'u32[]', space=smem, size = 0x4, offset = 0x4, fixed_abs, tag = 'smem constant byte address 0x4 - core index']
  #allocation1 [shape = 'u32[144,128]{1,0:T(1,128)}', space=vmem, size = 0x12000, scoped, tag = 'internal scratch']
  #allocation2 [shape = 'f32[8,32]{1,0:T(8,128)}', space=vmem, size = 0x1000, scoped, tag = 'scratch operand']
  #allocation3 [shape = 's32[1]{0}', space=sflag, size = 0x4, scoped, tag = 'scoped memory for fasttext_forward.1']
  #allocation4 [shape = 'u8[4096]{0}', space=smem, size = 0x1000, scoped, tag = 'prefetched SMEM operand 0']
  %s0 = inlined_call_operand.vmem [shape: s32[8,8], index: 0, kind: input, shape index: {}]
  %s1 = inlined_call_operand.vmem [shape: f32[51,32], index: 1, kind: input, shape index: {}]
  %s2 = inlined_call_operand.vmem [shape: f32[32,128], index: 2, kind: input, shape index: {}]
  %s3 = inlined_call_operand.vmem [shape: f32[1,128], index: 3, kind: input, shape index: {}]
  %s4 = inlined_call_operand.vmem [shape: f32[8,128], index: 4, kind: output, shape index: {}]
  %s5 = sld [smem:[#allocation0]]
  $region37: #{fasttext_forward.1} parent=0
    _
  %s7 = ssub.s32 1, %s5
  %s8 = scalar_select 0, %s7, %s5
  %s9 = sshll.u32 %s0, 4
  %s10 = int_to_ptr.vmem [resolvable:$true] %s9
  %12 = dma.vmem_to_smem %s10, 128, [#allocation4], [#allocation3]
  %13 = dma.done [#allocation3], 128
  %14 = sfence
  // Predicated region
  $region2: #{fasttext_forward.1} parent=0 // pred_check
    _
  $region3: #{fasttext_forward.1} parent=0 // pred_check_branch
    %16 = sbr.rel (0) target = $region5
  $region4: #{fasttext_forward.1} parent=0 // pred_region
    _
  $region5: #{fasttext_forward.1} parent=0 // pred_fallthru
    _
  // Predicated region
  $region6: #{fasttext_forward.1} parent=0 // pred_check
    _
  $region7: #{fasttext_forward.1} parent=0 // pred_check_branch
    %18 = sbr.rel (0) target = $region9
  $region8: #{fasttext_forward.1} parent=0 // pred_region
    _
  $region9: #{fasttext_forward.1} parent=0 // pred_fallthru
    _
  // Predicated region
  $region10: #{fasttext_forward.1} parent=0 // pred_check
    _
  $region11: #{fasttext_forward.1} parent=0 // pred_check_branch
    %20 = sbr.rel (0) target = $region13
  $region12: #{fasttext_forward.1} parent=0 // pred_region
    _
  $region13: #{fasttext_forward.1} parent=0 // pred_fallthru
    _
  %p21 = scmp.eq.s32.totalorder 0, 0
  // Predicated region
  $region14: #{fasttext_forward.1} parent=0 // pred_check
    %p22 = pneg %p21
  $region15: #{fasttext_forward.1} parent=0 // pred_check_branch
    %24 = sbr.rel (%p22) target = $region17
  $region16: #{fasttext_forward.1} parent=0 // pred_region
    %vm25 = vcmask 261120
    %26 = vst.msk [vmem:[#allocation2] sm:$0xff] %vm25, 0.0
  $region17: #{fasttext_forward.1} parent=0 // pred_fallthru
    _
  %s27 = smul.u32 0, 8
  %s28 = smul.u32 0, 8
  loop: start=0, step=1, limit=8
  $region18: #{fasttext_forward.1} parent=0 // loop_pre_header
    _
  $region19: #{fasttext_forward.1} parent=0 // loop_header
    %s30 = sphi 0, %s34
    %p31 = scmp.ge.s32.totalorder %s30, 8
  $region20: #{fasttext_forward.1} parent=0 // loop_header_branch
    %33 = sbr.rel (%p31) target = $region24
  $region21: #{fasttext_forward.1} parent=0 // loop_body
    %s35 = sadd.s32 %s27, %s30
    %s36 = sshra.s32 %s28, 7
    %s37 = sand.u32 %s28, 127
    %s38 = sadd.s32 %s36, %s35
    %s39 = smul.u32 %s38, 128
    %s40 = sshra.s32 %s28, 7
    %s41 = sand.u32 %s28, 127
    %s42 = sadd.s32 %s39, %s41
    %s43 = sld [smem:[#allocation4 + %s42]]
    %s44 = scalar_lea.vmem %s1, %s43
    %v45 = vld [vmem:[%s44] sm:$0x1]
    %v46 = vadd.f32 %v45, 0.0
    %s47 = sadd.s32 %s28, 1
    %s48 = sshra.s32 %s47, 7
    %s49 = sand.u32 %s47, 127
    %s50 = sadd.s32 %s48, %s35
    %s51 = smul.u32 %s50, 128
    %s52 = sshra.s32 %s47, 7
    %s53 = sand.u32 %s47, 127
    %s54 = sadd.s32 %s51, %s53
    %s55 = sld [smem:[#allocation4 + %s54]]
    %s56 = scalar_lea.vmem %s1, %s55
    %v57 = vld [vmem:[%s56] sm:$0x1]
    %v58 = vadd.f32 %v46, %v57
    %s59 = sadd.s32 %s28, 2
    %s60 = sshra.s32 %s59, 7
    %s61 = sand.u32 %s59, 127
    %s62 = sadd.s32 %s60, %s35
    %s63 = smul.u32 %s62, 128
    %s64 = sshra.s32 %s59, 7
    %s65 = sand.u32 %s59, 127
    %s66 = sadd.s32 %s63, %s65
    %s67 = sld [smem:[#allocation4 + %s66]]
    %s68 = scalar_lea.vmem %s1, %s67
    %v69 = vld [vmem:[%s68] sm:$0x1]
    %v70 = vadd.f32 %v58, %v69
    %s71 = sadd.s32 %s28, 3
    %s72 = sshra.s32 %s71, 7
    %s73 = sand.u32 %s71, 127
    %s74 = sadd.s32 %s72, %s35
    %s75 = smul.u32 %s74, 128
    %s76 = sshra.s32 %s71, 7
    %s77 = sand.u32 %s71, 127
    %s78 = sadd.s32 %s75, %s77
    %s79 = sld [smem:[#allocation4 + %s78]]
    %s80 = scalar_lea.vmem %s1, %s79
    %v81 = vld [vmem:[%s80] sm:$0x1]
    %v82 = vadd.f32 %v70, %v81
    %s83 = sadd.s32 %s28, 4
    %s84 = sshra.s32 %s83, 7
    %s85 = sand.u32 %s83, 127
    %s86 = sadd.s32 %s84, %s35
    %s87 = smul.u32 %s86, 128
    %s88 = sshra.s32 %s83, 7
    %s89 = sand.u32 %s83, 127
    %s90 = sadd.s32 %s87, %s89
    %s91 = sld [smem:[#allocation4 + %s90]]
    %s92 = scalar_lea.vmem %s1, %s91
    %v93 = vld [vmem:[%s92] sm:$0x1]
    %v94 = vadd.f32 %v82, %v93
    %s95 = sadd.s32 %s28, 5
    %s96 = sshra.s32 %s95, 7
    %s97 = sand.u32 %s95, 127
    %s98 = sadd.s32 %s96, %s35
    %s99 = smul.u32 %s98, 128
    %s100 = sshra.s32 %s95, 7
    %s101 = sand.u32 %s95, 127
    %s102 = sadd.s32 %s99, %s101
    %s103 = sld [smem:[#allocation4 + %s102]]
    %s104 = scalar_lea.vmem %s1, %s103
    %v105 = vld [vmem:[%s104] sm:$0x1]
    %v106 = vadd.f32 %v94, %v105
    %s107 = sadd.s32 %s28, 6
    %s108 = sshra.s32 %s107, 7
    %s109 = sand.u32 %s107, 127
    %s110 = sadd.s32 %s108, %s35
    %s111 = smul.u32 %s110, 128
    %s112 = sshra.s32 %s107, 7
    %s113 = sand.u32 %s107, 127
    %s114 = sadd.s32 %s111, %s113
    %s115 = sld [smem:[#allocation4 + %s114]]
    %s116 = scalar_lea.vmem %s1, %s115
    %v117 = vld [vmem:[%s116] sm:$0x1]
    %v118 = vadd.f32 %v106, %v117
    %s119 = sadd.s32 %s28, 7
    %s120 = sshra.s32 %s119, 7
    %s121 = sand.u32 %s119, 127
    %s122 = sadd.s32 %s120, %s35
    %s123 = smul.u32 %s122, 128
    %s124 = sshra.s32 %s119, 7
    %s125 = sand.u32 %s119, 127
    %s126 = sadd.s32 %s123, %s125
    %s127 = sld [smem:[#allocation4 + %s126]]
    %s128 = scalar_lea.vmem %s1, %s127
    %v129 = vld [vmem:[%s128] sm:$0x1]
    %v130 = vadd.f32 %v118, %v129
    %s131 = scalar_lea.vmem [#allocation2], %s30
    %v132 = vld [vmem:[%s131] sm:$0x1]
    %v133 = vadd.f32 %v132, %v130
    %vm134 = vcmask 253952
    %135 = vst.msk [vmem:[%s131] sm:$0x1] %vm134, %v133
  $region22: #{fasttext_forward.1} parent=0 // loop_footer
    %s34 = sadd.s32 1, %s30
  $region23: #{fasttext_forward.1} parent=0 // loop_footer_branch
    %29 = sbr.rel target = $region19
  $region24: #{fasttext_forward.1} parent=0 // loop_exit
    _
  // Predicated region
  $region25: #{fasttext_forward.1} parent=0 // pred_check
    %p136 = pneg %p21
  $region26: #{fasttext_forward.1} parent=0 // pred_check_branch
    %138 = sbr.rel (%p136) target = $region28
  $region27: #{fasttext_forward.1} parent=0 // pred_region
    %v139 = vld [vmem:[#allocation2] sm:$0xff]
    %v140 = vmul.f32 %v139, 0.125
    %v141 = vld [vmem:[%s2] sm:$0xff]
    %v142 = vld [vmem:[%s2 + $0x8] sm:$0xff]
    %v143 = vld [vmem:[%s2 + $0x10] sm:$0xff]
    %v144 = vld [vmem:[%s2 + $0x18] sm:$0xff]
    %v145 = vld [vmem:[%s3] sm:$0x1]
    %v147 = vlaneseq
    %v148 = vshrl.u32 %v147, 7
    %v149 = vsub.s32 0, %v148
    %v150 = vrot.slane %v145, %v149
    %vm152 = vcmask 261120
    %v154 = vsel %vm152, %v140, 0
    %156 = vmatprep.subr.mxu0 0.0
    %157 = vmatpush1.msra.mxu0 0.0
    %158 = vmatprep.subr.mxu0 0.0
    %159 = vmatpush1.msra.mxu0 0.0
    %160 = vmatprep.subr.mxu0 0.0
    %161 = vmatpush1.msra.mxu0 0.0
    %162 = vmatprep.subr.mxu0 0.0
    %163 = vmatpush1.msra.mxu0 0.0
    %164 = vmatprep.subr.mxu0 0.0
    %165 = vmatpush1.msra.mxu0 0.0
    %166 = vmatprep.subr.mxu0 0.0
    %167 = vmatpush1.msra.mxu0 0.0
    %168 = vmatprep.subr.mxu0 0.0
    %169 = vmatpush1.msra.mxu0 0.0
    %170 = vmatprep.subr.mxu0 0.0
    %171 = vmatpush1.msra.mxu0 0.0
    %172 = vmatprep.subr.mxu0 0.0
    %173 = vmatpush1.msra.mxu0 0.0
    %174 = vmatprep.subr.mxu0 0.0
    %175 = vmatpush1.msra.mxu0 0.0
    %176 = vmatprep.subr.mxu0 0.0
    %177 = vmatpush1.msra.mxu0 0.0
    %178 = vmatprep.subr.mxu0 0.0
    %179 = vmatpush1.msra.mxu0 0.0
    %180 = vmatprep.subr.mxu0 0.0
    %181 = vmatpush1.msra.mxu0 %v144
    %182 = vmatprep.subr.mxu0 0.0
    %183 = vmatpush1.msra.mxu0 %v143
    %184 = vmatprep.subr.mxu0 0.0
    %185 = vmatpush1.msra.mxu0 %v142
    %186 = vmatprep.subr.mxu0 0.0
    %187 = vmatpush1.msra.mxu0 %v141
    %188 = vmatprep.subr.mxu0 0.0
    %189 = vmatpush2.msra.mxu0 0.0
    %190 = vmatprep.subr.mxu0 0.0
    %191 = vmatpush2.msra.mxu0 0.0
    %192 = vmatprep.subr.mxu0 0.0
    %193 = vmatpush2.msra.mxu0 0.0
    %194 = vmatprep.subr.mxu0 0.0
    %195 = vmatpush2.msra.mxu0 0.0
    %196 = vmatprep.subr.mxu0 0.0
    %197 = vmatpush2.msra.mxu0 0.0
    %198 = vmatprep.subr.mxu0 0.0
    %199 = vmatpush2.msra.mxu0 0.0
    %200 = vmatprep.subr.mxu0 0.0
    %201 = vmatpush2.msra.mxu0 0.0
    %202 = vmatprep.subr.mxu0 0.0
    %203 = vmatpush2.msra.mxu0 0.0
    %204 = vmatprep.subr.mxu0 0.0
    %205 = vmatpush2.msra.mxu0 0.0
    %206 = vmatprep.subr.mxu0 0.0
    %207 = vmatpush2.msra.mxu0 0.0
    %208 = vmatprep.subr.mxu0 0.0
    %209 = vmatpush2.msra.mxu0 0.0
    %210 = vmatprep.subr.mxu0 0.0
    %211 = vmatpush2.msra.mxu0 0.0
    %212 = vmatprep.subr.mxu0 0.0
    %213 = vmatpush2.msra.mxu0 0.0
    %214 = vmatprep.subr.mxu0 0.0
    %215 = vmatpush2.msra.mxu0 0.0
    %216 = vmatprep.subr.mxu0 0.0
    %217 = vmatpush2.msra.mxu0 0.0
    %218 = vmatprep.subr.mxu0 0.0
    %219 = vmatpush2.msra.mxu0 0.0
    %220 = vmatprep.mubr.f32.mxu0 0.0
    %221 = vmatmul.mubr.f32.gmra.mxu0 %v154
    %v222 = vpop.f32.mrf.mxu0
    %v223 = vadd.f32 %v150, %v222
    %v224 = vpop.f32.mrf.mxu0
    %225 = vdwg.mxu0
    %226 = vst [vmem:[%s4] sm:$0xff] %v223
  $region28: #{fasttext_forward.1} parent=0 // pred_fallthru
    _
  // Predicated region
  $region29: #{fasttext_forward.1} parent=0 // pred_check
    _
  $region30: #{fasttext_forward.1} parent=0 // pred_check_branch
    %228 = sbr.rel (0) target = $region32
  $region31: #{fasttext_forward.1} parent=0 // pred_region
    _
  $region32: #{fasttext_forward.1} parent=0 // pred_fallthru
    _
  // Predicated region
  $region33: #{fasttext_forward.1} parent=0 // pred_check
    _
  $region34: #{fasttext_forward.1} parent=0 // pred_check_branch
    %230 = sbr.rel (0) target = $region36
  $region35: #{fasttext_forward.1} parent=0 // pred_region
    _
  $region36: #{fasttext_forward.1} parent=0 // pred_fallthru
    _

</llo_original>
